<compile_context>
chip_gen: v5e
topology: v5e:2x2
jax: 0.10.0
libtpu: 0.0.40
codegen_flags: <defaults>
</compile_context>

<pallas_src>
import functools
import math

import jax
import jax.numpy as jnp
from jax.experimental import pallas as pl
from jax.experimental.pallas import tpu as pltpu


# ----------------------------------------------------------------------------
# helpers
# ----------------------------------------------------------------------------

def _pick_tile(dim, desired, align):
    """Largest multiple of `align` <= desired that divides dim; else dim (full)."""
    if dim <= desired:
        return dim
    t = (desired // align) * align
    while t >= align:
        if dim % t == 0:
            return t
        t -= align
    # TODO(synk): on v7x (64 MiB VMEM) handle awkward dims with pl.cdiv +
    # masked edge tiles instead of falling back to the full dimension.
    return dim


def rotary_tables(seq_len, head_dim, base=10000.0):
    freq = 1.0 / (base ** (jnp.arange(0, head_dim, 2, dtype=jnp.float32) / head_dim))
    pos = jnp.arange(seq_len, dtype=jnp.float32)
    angles = jnp.einsum("p,f->pf", pos, freq)          # (S, D/2)
    emb = jnp.concatenate([angles, angles], axis=-1)   # (S, D)
    return jnp.cos(emb), jnp.sin(emb)


# ----------------------------------------------------------------------------
# tiled / pipelined matmul kernel (fused QKV projection + output projection)
# ----------------------------------------------------------------------------

def _matmul_kernel(x_ref, w_ref, o_ref, acc_ref):
    @pl.when(pl.program_id(2) == 0)
    def _():
        acc_ref[...] = jnp.zeros_like(acc_ref)

    # Inputs arrive already in compute dtype (bf16 by default) -> full-rate MXU;
    # accumulation is always f32.
    acc_ref[...] += jnp.dot(x_ref[...], w_ref[...],
                            preferred_element_type=jnp.float32)

    @pl.when(pl.program_id(2) == pl.num_programs(2) - 1)
    def _():
        o_ref[...] = acc_ref[...].astype(o_ref.dtype)


def linear(x, w_t, *, tm_hint=512, tn_hint=512, tk_hint=512):
    """x: (M, K) @ w_t: (K, N) -> (M, N), tiled + double-buffered on the MXU."""
    M, K = x.shape
    K2, N = w_t.shape
    assert K == K2
    tm = _pick_tile(M, tm_hint, 8)
    tn = _pick_tile(N, tn_hint, 128)
    tk = _pick_tile(K, tk_hint, 128)
    grid = (M // tm, N // tn, K // tk)
    return pl.pallas_call(
        _matmul_kernel,
        out_shape=jax.ShapeDtypeStruct((M, N), x.dtype),
        grid_spec=pltpu.PrefetchScalarGridSpec(
            num_scalar_prefetch=0,
            grid=grid,
            in_specs=[
                pl.BlockSpec((tm, tk), lambda i, j, k: (i, k)),
                pl.BlockSpec((tk, tn), lambda i, j, k: (k, j)),
            ],
            out_specs=pl.BlockSpec((tm, tn), lambda i, j, k: (i, j)),
            scratch_shapes=[pltpu.VMEM((tm, tn), jnp.float32)],
        ),
        compiler_params=pltpu.CompilerParams(
            dimension_semantics=("parallel", "parallel", "arbitrary"),
        ),
    )(x, w_t)


# ----------------------------------------------------------------------------
# RoPE pre-pass kernel (K only: once per KV head; Q's RoPE is fused into flash)
# ----------------------------------------------------------------------------

def _rope_kernel(x_ref, cos_ref, sin_ref, o_ref):
    x = x_ref[0, 0].astype(jnp.float32)     # (ts, D)
    cos = cos_ref[...]
    sin = sin_ref[...]
    half = x.shape[-1] // 2
    # rotate_half(x) = concat(-x2, x1)
    # TODO(synk): for lane-aligned head_dim (>=128), pltpu.roll + a sign-folded
    # sin table would move the rotation onto the otherwise-idle XLU slot.
    x_rot = jnp.concatenate([-x[:, half:], x[:, :half]], axis=-1)
    o_ref[0, 0] = (x * cos + x_rot * sin).astype(o_ref.dtype)


def apply_rope(x, cos, sin, *, ts_hint=512):
    """x: (B, N, S, D); cos/sin: (S, D)."""
    B, N, S, D = x.shape
    ts = _pick_tile(S, ts_hint, 8)
    grid = (B, N, S // ts)
    return pl.pallas_call(
        _rope_kernel,
        out_shape=jax.ShapeDtypeStruct(x.shape, x.dtype),
        grid_spec=pltpu.PrefetchScalarGridSpec(
            num_scalar_prefetch=0,
            grid=grid,
            in_specs=[
                pl.BlockSpec((1, 1, ts, D), lambda b, n, si: (b, n, si, 0)),
                pl.BlockSpec((ts, D), lambda b, n, si: (si, 0)),
                pl.BlockSpec((ts, D), lambda b, n, si: (si, 0)),
            ],
            out_specs=pl.BlockSpec((1, 1, ts, D), lambda b, n, si: (b, n, si, 0)),
        ),
        compiler_params=pltpu.CompilerParams(
            dimension_semantics=("parallel", "parallel", "parallel"),
        ),
    )(x, cos, sin)


# ----------------------------------------------------------------------------
# flash-style attention kernel: GQA group per step, fused Q-RoPE, online softmax
# ----------------------------------------------------------------------------

def _flash_attn_kernel(q_ref, k_ref, v_ref, cosq_ref, sinq_ref, mask_ref, o_ref,
                       q_sc, m_sc, l_sc, acc_sc, *, n_rep, compute_dtype):
    ki = pl.program_id(3)

    @pl.when(ki == 0)
    def _():
        # Apply RoPE (with the 1/sqrt(D) scale pre-folded into cos/sin) to the
        # whole n_rep query-head group once per (b, kv_head, q-tile); the result
        # stays resident in VMEM scratch and is reused across every ki step.
        q = q_ref[0, 0].astype(jnp.float32).reshape(q_sc.shape)   # (n_rep*tq, D)
        cos = jnp.tile(cosq_ref[...], (n_rep, 1))                  # (n_rep*tq, D)
        sin = jnp.tile(sinq_ref[...], (n_rep, 1))
        half = q.shape[-1] // 2
        q_rot = jnp.concatenate([-q[:, half:], q[:, :half]], axis=-1)
        q_sc[...] = (q * cos + q_rot * sin).astype(q_sc.dtype)
        m_sc[...] = jnp.full_like(m_sc, -jnp.inf)
        l_sc[...] = jnp.zeros_like(l_sc)
        acc_sc[...] = jnp.zeros_like(acc_sc)

    k = k_ref[0, 0]                          # (tk, D), RoPE'd, shared by group
    v = v_ref[0, 0]                          # (tk, D)

    # QK^T for the whole GQA group as one MXU matmul, contraction over D,
    # f32 accumulation, no explicit transpose of K.
    s = jax.lax.dot_general(q_sc[...], k, (((1,), (1,)), ((), ())),
                            preferred_element_type=jnp.float32)   # (n_rep*tq, tk)
    # same (tq, tk) additive mask for every head in the group
    s = s + jnp.tile(mask_ref[0, 0], (n_rep, 1))

    m_prev = m_sc[...]
    m_new = jnp.maximum(m_prev, jnp.max(s, axis=-1, keepdims=True))
    alpha = jnp.exp(m_prev - m_new)
    p = jnp.exp(s - m_new)
    l_sc[...] = alpha * l_sc[...] + jnp.sum(p, axis=-1, keepdims=True)
    acc_sc[...] = alpha * acc_sc[...] + jnp.dot(
        p.astype(compute_dtype), v, preferred_element_type=jnp.float32)
    m_sc[...] = m_new

    @pl.when(ki == pl.num_programs(3) - 1)
    def _():
        # Exact reciprocal in the once-per-tile finalize; clamp l so a fully
        # masked row cannot produce Inf/NaN.
        l = jnp.maximum(l_sc[...], 1e-30)
        o = acc_sc[...] / l
        o_ref[0, 0] = o.reshape(o_ref.shape[2:]).astype(o_ref.dtype)


def flash_attention(q, k, v, cos_q, sin_q, mask, *, compute_dtype,
                    tq_hint=512, tk_hint=512):
    """q: (B, KVH, n_rep, S, D); k/v: (B, KVH, S, D); mask: (1 or B, 1, S, S)."""
    B, KVH, n_rep, S, D = q.shape
    tq = _pick_tile(S, tq_hint, 8)
    tk = _pick_tile(S, tk_hint, 128)
    grid = (B, KVH, S // tq, S // tk)

    if mask.shape[0] == 1:
        mask_map = lambda b, h, qi, ki: (0, 0, qi, ki)
    else:
        mask_map = lambda b, h, qi, ki: (b, 0, qi, ki)

    kernel = functools.partial(_flash_attn_kernel, n_rep=n_rep,
                               compute_dtype=compute_dtype)
    return pl.pallas_call(
        kernel,
        out_shape=jax.ShapeDtypeStruct((B, KVH, n_rep, S, D), q.dtype),
        grid_spec=pltpu.PrefetchScalarGridSpec(
            num_scalar_prefetch=0,
            grid=grid,
            in_specs=[
                # Q: whole GQA group per step; block index constant in ki, so
                # the tile is DMA'd once per (b, kv_head, qi).
                pl.BlockSpec((1, 1, n_rep, tq, D),
                             lambda b, h, qi, ki: (b, h, 0, qi, 0)),
                # K/V: streamed once per KV head (n_rep x less HBM traffic).
                pl.BlockSpec((1, 1, tk, D), lambda b, h, qi, ki: (b, h, ki, 0)),
                pl.BlockSpec((1, 1, tk, D), lambda b, h, qi, ki: (b, h, ki, 0)),
                # Q RoPE tables (scale folded), indexed by the q-tile only.
                pl.BlockSpec((tq, D), lambda b, h, qi, ki: (qi, 0)),
                pl.BlockSpec((tq, D), lambda b, h, qi, ki: (qi, 0)),
                # additive mask, tile-by-tile; batch handled in the index_map.
                pl.BlockSpec((1, 1, tq, tk), mask_map),
            ],
            out_specs=pl.BlockSpec((1, 1, n_rep, tq, D),
                                   lambda b, h, qi, ki: (b, h, 0, qi, 0)),
            scratch_shapes=[
                pltpu.VMEM((n_rep * tq, D), compute_dtype),   # RoPE'd, scaled Q
                pltpu.VMEM((n_rep * tq, 1), jnp.float32),     # running max m
                pltpu.VMEM((n_rep * tq, 1), jnp.float32),     # running denom l
                pltpu.VMEM((n_rep * tq, D), jnp.float32),     # output accumulator
            ],
        ),
        compiler_params=pltpu.CompilerParams(
            dimension_semantics=("parallel", "parallel", "parallel", "arbitrary"),
        ),
    )(q, k, v, cos_q, sin_q, mask)


# ----------------------------------------------------------------------------
# RopeAttention forward (glue in plain JAX, hot paths in Pallas)
# ----------------------------------------------------------------------------

def prepare_params(params, dtype=jnp.bfloat16):
    """One-time weight prep: fuse QKV, pre-transpose (PyTorch stores (out, in)),
    and pre-cast to the MXU compute dtype (bf16 by default)."""
    w_qkv = jnp.concatenate(
        [params["W_query"].T, params["W_key"].T, params["W_value"].T], axis=1)
    return {"w_qkv": w_qkv.astype(dtype), "w_out": params["W_output"].T.astype(dtype)}


def rope_attention_forward(hidden_states, attention_mask, prepared, cfg,
                           *, compute_dtype=jnp.bfloat16):
    """hidden_states: (B, S, hidden); attention_mask: (1 or B, 1, S, S) additive."""
    B, S, Hd = hidden_states.shape
    num_heads = cfg["num_heads"]
    kv_heads = cfg["kv_heads"]
    head_dim = Hd // num_heads
    n_rep = num_heads // kv_heads
    out_dtype = hidden_states.dtype

    x2d = hidden_states.reshape(B * S, Hd).astype(compute_dtype)

    # fused Q/K/V projection: one tiled GEMM, x read from HBM once
    qkv = linear(x2d, prepared["w_qkv"])
    q_dim = num_heads * head_dim
    kv_dim = kv_heads * head_dim
    q = qkv[:, :q_dim]
    k = qkv[:, q_dim:q_dim + kv_dim]
    v = qkv[:, q_dim + kv_dim:]

    # TODO(synk): for production head_dim (>=128) read Q/K/V tiles directly out
    # of the 2D qkv buffer via column-offset index_maps and skip these XLA
    # reshapes/transposes entirely.
    q = (q.reshape(B, S, num_heads, head_dim).transpose(0, 2, 1, 3)
          .reshape(B, kv_heads, n_rep, S, head_dim))
    k = k.reshape(B, S, kv_heads, head_dim).transpose(0, 2, 1, 3)
    v = v.reshape(B, S, kv_heads, head_dim).transpose(0, 2, 1, 3)

    cos, sin = rotary_tables(S, head_dim, base=10000.0)
    inv_scale = 1.0 / math.sqrt(head_dim)

    # K's RoPE: small pre-pass, once per KV head.  Q's RoPE (+ the attention
    # scale, folded into its cos/sin tables) is fused into the flash kernel.
    k = apply_rope(k, cos, sin)

    attn = flash_attention(q, k, v, cos * inv_scale, sin * inv_scale,
                           attention_mask, compute_dtype=compute_dtype)

    attn = (attn.reshape(B, num_heads, S, head_dim)
                .transpose(0, 2, 1, 3).reshape(B * S, Hd))
    out = linear(attn, prepared["w_out"])
    return out.reshape(B, S, Hd).astype(out_dtype)


# ----------------------------------------------------------------------------
# Pure-JAX reference (mirrors the PyTorch module) for validation
# ----------------------------------------------------------------------------

def reference_forward(hidden_states, attention_mask, params, cfg):
    B, S, Hd = hidden_states.shape
    num_heads = cfg["num_heads"]
    kv_heads = cfg["kv_heads"]
    head_dim = Hd // num_heads
    n_rep = num_heads // kv_heads

    q = hidden_states @ params["W_query"].T
    k = hidden_states @ params["W_key"].T
    v = hidden_states @ params["W_value"].T
    q = q.reshape(B, S, num_heads, head_dim).transpose(0, 2, 1, 3)
    k = k.reshape(B, S, kv_heads, head_dim).transpose(0, 2, 1, 3)
    v = v.reshape(B, S, kv_heads, head_dim).transpose(0, 2, 1, 3)

    cos, sin = rotary_tables(S, head_dim)
    cos = cos[None, None]
    sin = sin[None, None]

    def rot_half(x):
        x1 = x[..., : head_dim // 2]
        x2 = x[..., head_dim // 2:]
        return jnp.concatenate([-x2, x1], axis=-1)

    q = q * cos + rot_half(q) * sin
    k = k * cos + rot_half(k) * sin

    k = jnp.repeat(k, n_rep, axis=1)
    v = jnp.repeat(v, n_rep, axis=1)

    w = jnp.einsum("bhqd,bhkd->bhqk", q, k) / math.sqrt(head_dim)
    w = w + attention_mask
    w = jax.nn.softmax(w, axis=-1)
    o = jnp.einsum("bhqk,bhkd->bhqd", w, v)
    o = o.transpose(0, 2, 1, 3).reshape(B, S, Hd)
    return o @ params["W_output"].T


# ----------------------------------------------------------------------------

if __name__ == "__main__":
    # config (small, consistent with the module)
    cfg = dict(hidden_size=32, num_heads=4, kv_heads=2)
    B, S = 2, 8
    Hd = cfg["hidden_size"]
    head_dim = Hd // cfg["num_heads"]

    key = jax.random.PRNGKey(0)
    kx, kq, kk, kv_, ko = jax.random.split(key, 5)

    def init_linear(k, out_f, in_f):
        bound = 1.0 / math.sqrt(in_f)
        return jax.random.uniform(k, (out_f, in_f), jnp.float32, -bound, bound)

    params = {
        "W_query": init_linear(kq, cfg["num_heads"] * head_dim, Hd),
        "W_key": init_linear(kk, cfg["kv_heads"] * head_dim, Hd),
        "W_value": init_linear(kv_, cfg["kv_heads"] * head_dim, Hd),
        "W_output": init_linear(ko, Hd, Hd),
    }
    prepared_f32 = prepare_params(params, dtype=jnp.float32)
    prepared_bf16 = prepare_params(params, dtype=jnp.bfloat16)

    hidden_states = jax.random.normal(kx, (B, S, Hd), jnp.float32)

    # additive causal attention mask; kept at batch 1 — the kernel resolves the
    # batch index in the BlockSpec instead of materializing B copies in HBM.
    causal = jnp.tril(jnp.ones((S, S), jnp.float32))
    mask = jnp.where(causal == 1.0, 0.0, -1e9)[None, None]   # (1, 1, S, S)

    # f32 compute path: tight numerical check against the reference.
    out = rope_attention_forward(hidden_states, mask, prepared_f32, cfg,
                                 compute_dtype=jnp.float32)
    # default bf16 compute path: the full-rate MXU configuration used in prod.
    out_bf16 = rope_attention_forward(hidden_states, mask, prepared_bf16, cfg)
    out, out_bf16 = jax.block_until_ready((out, out_bf16))

    ref = reference_forward(hidden_states, mask, params, cfg)
    assert out.shape == (B, S, Hd)
    assert out_bf16.shape == (B, S, Hd)
    assert jnp.allclose(out, ref, atol=2e-3, rtol=2e-3), (
        f"f32 max abs err = {jnp.max(jnp.abs(out - ref))}"
    )
    assert jnp.allclose(out_bf16, ref, atol=1e-1, rtol=1e-1), (
        f"bf16 max abs err = {jnp.max(jnp.abs(out_bf16 - ref))}"
    )

    print("KERNEL_OK")
</pallas_src>

<mosaic_0001>
module attributes {stable_mosaic.version = 11 : i64} {
  func.func @_matmul_kernel(%arg0: i32, %arg1: i32, %arg2: i32, %arg3: memref<16x32xf32, #tpu.memory_space<vmem>>, %arg4: memref<32x64xf32, #tpu.memory_space<vmem>>, %arg5: memref<16x64xf32, #tpu.memory_space<vmem>>, %arg6: memref<16x64xf32, #tpu.memory_space<vmem>>) attributes {dimension_semantics = [#tpu.dimension_semantics<parallel>, #tpu.dimension_semantics<parallel>, #tpu.dimension_semantics<arbitrary>], iteration_bounds = array<i64: 1, 1, 1>, scalar_prefetch = 0 : i64, scratch_operands = 1 : i64, tpu.core_type = #tpu.core_type<tc>, window_params = [{transform_indices = @transform_0, window_bounds = array<i64: 16, 32>}, {transform_indices = @transform_1, window_bounds = array<i64: 32, 64>}, {transform_indices = @transform_2, window_bounds = array<i64: 16, 64>}]} {
    %c0_i32 = arith.constant 0 : i32
    %0 = arith.cmpi eq, %arg2, %c0_i32 : i32
    %1 = arith.extui %0 : i1 to i32
    %c0_i32_0 = arith.constant 0 : i32
    %2 = arith.cmpi ne, %1, %c0_i32_0 : i32
    scf.if %2 {
      %cst_10 = arith.constant 0.000000e+00 : f32
      %12 = vector.broadcast %cst_10 : f32 to vector<16x64xf32>
      %c0_11 = arith.constant 0 : index
      %c0_12 = arith.constant 0 : index
      %13 = vector.load %arg6[%c0_11, %c0_12] : memref<16x64xf32, #tpu.memory_space<vmem>>, vector<16x64xf32>
      tpu.vector_store %arg6[%c0_11, %c0_12], %12 {strides = array<i32>} : memref<16x64xf32, #tpu.memory_space<vmem>>, vector<16x64xf32>,
    } else {
    }
    %c0 = arith.constant 0 : index
    %c0_1 = arith.constant 0 : index
    %3 = vector.load %arg6[%c0, %c0_1] : memref<16x64xf32, #tpu.memory_space<vmem>>, vector<16x64xf32>
    %c0_2 = arith.constant 0 : index
    %c0_3 = arith.constant 0 : index
    %4 = vector.load %arg3[%c0_2, %c0_3] : memref<16x32xf32, #tpu.memory_space<vmem>>, vector<16x32xf32>
    %c0_4 = arith.constant 0 : index
    %c0_5 = arith.constant 0 : index
    %5 = vector.load %arg4[%c0_4, %c0_5] : memref<32x64xf32, #tpu.memory_space<vmem>>, vector<32x64xf32>
    %cst = arith.constant dense<0.000000e+00> : vector<16x64xf32>
    %6 = tpu.matmul %4, %5, %cst {dimension_numbers = #tpu.dot_dimension_numbers<[1], [0], [0], [1], [0, 0, 1, 1], [], []>} : vector<16x32xf32>, vector<32x64xf32>, vector<16x64xf32> -> vector<16x64xf32>
    %7 = arith.addf %3, %6 : vector<16x64xf32>
    %c0_6 = arith.constant 0 : index
    %c0_7 = arith.constant 0 : index
    %8 = vector.load %arg6[%c0_6, %c0_7] : memref<16x64xf32, #tpu.memory_space<vmem>>, vector<16x64xf32>
    tpu.vector_store %arg6[%c0_6, %c0_7], %7 {strides = array<i32>} : memref<16x64xf32, #tpu.memory_space<vmem>>, vector<16x64xf32>,
    %c0_i32_8 = arith.constant 0 : i32
    %9 = arith.cmpi eq, %arg2, %c0_i32_8 : i32
    %10 = arith.extui %9 : i1 to i32
    %c0_i32_9 = arith.constant 0 : i32
    %11 = arith.cmpi ne, %10, %c0_i32_9 : i32
    scf.if %11 {
      %c0_10 = arith.constant 0 : index
      %c0_11 = arith.constant 0 : index
      %12 = vector.load %arg6[%c0_10, %c0_11] : memref<16x64xf32, #tpu.memory_space<vmem>>, vector<16x64xf32>
      %c0_12 = arith.constant 0 : index
      %c0_13 = arith.constant 0 : index
      %13 = vector.load %arg5[%c0_12, %c0_13] : memref<16x64xf32, #tpu.memory_space<vmem>>, vector<16x64xf32>
      tpu.vector_store %arg5[%c0_12, %c0_13], %12 {strides = array<i32>} : memref<16x64xf32, #tpu.memory_space<vmem>>, vector<16x64xf32>,
    } else {
    }
    return
  }
  func.func @transform_0(%arg0: i32, %arg1: i32, %arg2: i32) -> (i32, i32) {
    %c0_i32 = arith.constant 0 : i32
    return %arg0, %arg2 : i32, i32
  }
  func.func @transform_1(%arg0: i32, %arg1: i32, %arg2: i32) -> (i32, i32) {
    %c0_i32 = arith.constant 0 : i32
    return %arg2, %arg1 : i32, i32
  }
  func.func @transform_2(%arg0: i32, %arg1: i32, %arg2: i32) -> (i32, i32) {
    %c0_i32 = arith.constant 0 : i32
    return %arg0, %arg1 : i32, i32
  }
}

</mosaic_0001>

<llo_original>
// kernel: tpu_custom_call.1
$region0: #{tpu_custom_call.1}
  #allocation0 [shape = 'u32[]', space=smem, size = 0x4, offset = 0x4, fixed_abs, tag = 'smem constant byte address 0x4 - core index']
  #allocation1 [shape = 'u32[72,128]{1,0:T(1,128)}', space=vmem, size = 0x9000, scoped, tag = 'internal scratch']
  #allocation2 [shape = 'f32[16,64]{1,0:T(8,128)}', space=vmem, size = 0x2000, scoped, tag = 'scratch operand']
  %s0 = inlined_call_operand.hbm [shape: f32[16,32], index: 0, kind: input, shape index: {}]
  %s1 = inlined_call_operand.hbm [shape: f32[32,64], index: 1, kind: input, shape index: {}]
  %s2 = inlined_call_operand.hbm [shape: f32[16,64], index: 2, kind: output, shape index: {}]
  %s3 = sld [smem:[#allocation0]]
  $region34: #{tpu_custom_call.1} parent=0
    _
  %s5 = ssub.s32 1, %s3
  %s6 = scalar_select 0, %s5, %s3
  $region1: #{tpu_custom_call.1} parent=0
    #allocation3 [shape = 'u8[8192]{0}', space=vmem, size = 0x2000, scoped, tag = 'input window, operand 0, single buffered']
    #allocation4 [shape = 's32[1]{0}', space=sflag, size = 0x4, scoped, tag = 'scoped memory for tpu_custom_call.1']
    #allocation5 [shape = 's32[1]{0}', space=sflag, size = 0x4, scoped, tag = 'scoped memory for tpu_custom_call.1']
    #allocation6 [shape = 'u8[16384]{0}', space=vmem, size = 0x4000, scoped, tag = 'input window, operand 1, single buffered']
    #allocation7 [shape = 's32[1]{0}', space=sflag, size = 0x4, scoped, tag = 'scoped memory for tpu_custom_call.1']
    #allocation8 [shape = 'u8[8192]{0}', space=vmem, size = 0x2000, scoped, tag = 'output window, operand 0, single buffered']
    %7 = vsyncpa [#allocation4], 0
    %8 = vsyncpa [#allocation7], 0
    %9 = vsyncpa [#allocation5], 0
    // Predicated region
    $region2: #{tpu_custom_call.1} parent=1 // pred_check
      _
    $region3: #{tpu_custom_call.1} parent=1 // pred_check_branch
      %11 = sbr.rel (0) target = $region5
    $region4: #{tpu_custom_call.1} parent=1 // pred_region
      %13 = vsyncadd [#allocation4], 0
      %s14 = sshll.u32 %s0, 4
      %s15 = int_to_ptr.hbm [resolvable:$true] %s14
      %s16 = sshll.u32 [#allocation3], 4
      %s17 = int_to_ptr.vmem [resolvable:$true] %s16
      %22 = dma.hbm_to_vmem [thread:$0]  %s15, 256, %s17, [#allocation4], 128, 128, 8
    $region5: #{tpu_custom_call.1} parent=1 // pred_fallthru
      _
    // Predicated region
    $region6: #{tpu_custom_call.1} parent=1 // pred_check
      _
    $region7: #{tpu_custom_call.1} parent=1 // pred_check_branch
      %24 = sbr.rel (0) target = $region9
    $region8: #{tpu_custom_call.1} parent=1 // pred_region
      %26 = vsyncadd [#allocation7], 0
      %s27 = sshll.u32 %s1, 4
      %s28 = int_to_ptr.hbm [resolvable:$true] %s27
      %s29 = sshll.u32 [#allocation6], 4
      %s30 = int_to_ptr.vmem [resolvable:$true] %s29
      %35 = dma.hbm_to_vmem [thread:$0]  %s28, 512, %s30, [#allocation7], 128, 128, 8
    $region9: #{tpu_custom_call.1} parent=1 // pred_fallthru
      _
    // Predicated region
    $region10: #{tpu_custom_call.1} parent=1 // pred_check
      _
    $region11: #{tpu_custom_call.1} parent=1 // pred_check_branch
      %37 = sbr.rel (0) target = $region13
    $region12: #{tpu_custom_call.1} parent=1 // pred_region
      %39 = dma.done [#allocation4], 256
    $region13: #{tpu_custom_call.1} parent=1 // pred_fallthru
      _
    // Predicated region
    $region14: #{tpu_custom_call.1} parent=1 // pred_check
      _
    $region15: #{tpu_custom_call.1} parent=1 // pred_check_branch
      %41 = sbr.rel (0) target = $region17
    $region16: #{tpu_custom_call.1} parent=1 // pred_region
      %43 = dma.done [#allocation7], 512
    $region17: #{tpu_custom_call.1} parent=1 // pred_fallthru
      _
    %p44 = scmp.eq.s32.totalorder 0, 0
    // Predicated region
    $region18: #{tpu_custom_call.1} parent=1 // pred_check
      %p45 = pneg %p44
    $region19: #{tpu_custom_call.1} parent=1 // pred_check_branch
      %47 = sbr.rel (%p45) target = $region21
    $region20: #{tpu_custom_call.1} parent=1 // pred_region
      %vm48 = vcmask 523264
      %49 = vst.msk [vmem:[#allocation2] sm:$0xff] %vm48, 0.0
      %50 = vst.msk [vmem:[#allocation2 + $0x8] sm:$0xff] %vm48, 0.0
    $region21: #{tpu_custom_call.1} parent=1 // pred_fallthru
      _
    %v51 = vld [vmem:[#allocation2] sm:$0xff]
    %v52 = vld [vmem:[#allocation2 + $0x8] sm:$0xff]
    %v53 = vld [vmem:[#allocation3] sm:$0xff]
    %v54 = vld [vmem:[#allocation3 + $0x8] sm:$0xff]
    %v55 = vld [vmem:[#allocation6] sm:$0xff]
    %v56 = vld [vmem:[#allocation6 + $0x8] sm:$0xff]
    %v57 = vld [vmem:[#allocation6 + $0x10] sm:$0xff]
    %v58 = vld [vmem:[#allocation6 + $0x18] sm:$0xff]
    %vm59 = vcmask 261120
    %v61 = vsel %vm59, %v53, 0
    %v64 = vsel %vm59, %v54, 0
    %66 = vmatpush.msra.mxu0 0.0
    %67 = vmatpush.msra.mxu0 0.0
    %68 = vmatpush.msra.mxu0 0.0
    %69 = vmatpush.msra.mxu0 0.0
    %70 = vmatpush.msra.mxu0 0.0
    %71 = vmatpush.msra.mxu0 0.0
    %72 = vmatpush.msra.mxu0 0.0
    %73 = vmatpush.msra.mxu0 0.0
    %74 = vmatpush.msra.mxu0 0.0
    %75 = vmatpush.msra.mxu0 0.0
    %76 = vmatpush.msra.mxu0 0.0
    %77 = vmatpush.msra.mxu0 0.0
    %78 = vmatpush.msra.mxu0 %v58
    %79 = vmatpush.msra.mxu0 %v57
    %80 = vmatpush.msra.mxu0 %v56
    %81 = vmatpush.msra.mxu0 %v55
    %82 = vmatmul.f32.gmra.mxu0 %v61
    %v83 = vpop.f32.mrf.mxu0
    %v84 = vadd.f32 0.0, %v83
    %85 = vmatmul.f32.gmra.mxu0 %v64
    %v86 = vpop.f32.mrf.mxu0
    %v87 = vadd.f32 0.0, %v86
    %88 = vdwg.mxu0
    %v89 = vadd.f32 %v51, %v84
    %v90 = vadd.f32 %v52, %v87
    %vm91 = vcmask 523264
    %92 = vst.msk [vmem:[#allocation2] sm:$0xff] %vm91, %v89
    %93 = vst.msk [vmem:[#allocation2 + $0x8] sm:$0xff] %vm91, %v90
    // Predicated region
    $region22: #{tpu_custom_call.1} parent=1 // pred_check
      %p94 = pneg %p44
    $region23: #{tpu_custom_call.1} parent=1 // pred_check_branch
      %96 = sbr.rel (%p94) target = $region25
    $region24: #{tpu_custom_call.1} parent=1 // pred_region
      %v97 = vld [vmem:[#allocation2] sm:$0xff]
      %v98 = vld [vmem:[#allocation2 + $0x8] sm:$0xff]
      %99 = vst.msk [vmem:[#allocation8] sm:$0xff] %vm91, %v97
      %100 = vst.msk [vmem:[#allocation8 + $0x8] sm:$0xff] %vm91, %v98
    $region25: #{tpu_custom_call.1} parent=1 // pred_fallthru
      _
    // Predicated region
    $region26: #{tpu_custom_call.1} parent=1 // pred_check
      _
    $region27: #{tpu_custom_call.1} parent=1 // pred_check_branch
      %102 = sbr.rel (0) target = $region29
    $region28: #{tpu_custom_call.1} parent=1 // pred_region
      %104 = vsyncadd [#allocation5], 0
      %s105 = sshll.u32 [#allocation8], 4
      %s106 = int_to_ptr.vmem [resolvable:$true] %s105
      %s107 = sshll.u32 %s2, 4
      %s108 = int_to_ptr.hbm [resolvable:$true] %s107
      %113 = dma.vmem_to_hbm [thread:$0]  %s106, 256, %s108, [#allocation5], 128, 128, 8
    $region29: #{tpu_custom_call.1} parent=1 // pred_fallthru
      _
    // Predicated region
    $region30: #{tpu_custom_call.1} parent=1 // pred_check
      _
    $region31: #{tpu_custom_call.1} parent=1 // pred_check_branch
      %115 = sbr.rel (0) target = $region33
    $region32: #{tpu_custom_call.1} parent=1 // pred_region
      %117 = dma.done [#allocation5], 256
    $region33: #{tpu_custom_call.1} parent=1 // pred_fallthru
      _
    %118 = vsyncpa [#allocation4], 1
    %119 = vsyncpa [#allocation7], 1
    %120 = vsyncpa [#allocation5], 1

</llo_original>
